<compile_context>
chip_gen: v7x
topology: tpu7x:2x2x1
jax: 0.10.0
libtpu: 0.0.40
codegen_flags: <defaults>
</compile_context>

<pallas_src>
import functools

import jax
import jax.numpy as jnp
from jax.experimental import pallas as pl
from jax.experimental.pallas import tpu as pltpu

_NEG_INF = -1e30  # finite "-inf" for padded softmax columns (avoids inf-inf NaNs)


def _round_up(x, m):
    return ((x + m - 1) // m) * m


def _decoder_kernel(y_ref, w_ref, b_ref, o_ref):
    # y_ref: (TB, NK) bf16/f32   w_ref: (NK, Dp) bf16/f32
    # b_ref: (1, Dp)  f32        o_ref: (TB, Dp) f32
    logits = (
        jnp.dot(y_ref[...], w_ref[...], preferred_element_type=jnp.float32)
        + b_ref[...]
    )
    # log-softmax over the feature (last) axis, numerically stable.
    m = jnp.max(logits, axis=-1, keepdims=True)
    z = logits - m
    lse = jnp.log(jnp.sum(jnp.exp(z), axis=-1, keepdims=True))
    o_ref[...] = (z - lse).astype(o_ref.dtype)


@functools.partial(jax.jit, static_argnames=("block_b", "use_bf16_inputs"))
def decoder_forward(y, w, b, *, block_b=256, use_bf16_inputs=True):
    """y: (B, N*K) f32, w: (N*K, D) f32, b: (D,) f32 -> (B, D) f32 log-probs."""
    B, NK = y.shape
    D = w.shape[1]

    # --- Lane-dense feature padding (784 -> 896 = 7*128). ---
    D_pad = _round_up(D, 128)
    if D_pad != D:
        w = jnp.pad(w, ((0, 0), (0, D_pad - D)))
        # Large-negative bias in padded columns => exp(.) == 0, softmax
        # denominator over the real D columns is untouched.
        b = jnp.pad(b, (0, D_pad - D), constant_values=_NEG_INF)

    # --- Batch tiling: big tile for real batches, clamped for tiny ones. ---
    tb = min(block_b, _round_up(B, 8))
    tb = _round_up(tb, 8)
    B_pad = _round_up(B, tb)
    if B_pad != B:
        y = jnp.pad(y, ((0, B_pad - B), (0, 0)))  # padded rows sliced off below

    if use_bf16_inputs:
        y = y.astype(jnp.bfloat16)
        w = w.astype(jnp.bfloat16)
    b2 = b.reshape(1, D_pad).astype(jnp.float32)

    grid = (B_pad // tb,)
    # VMEM footprint at tb=256: out f32 tile ~0.92 MB (x2 buffers), W ~64 KB,
    # y tile ~18 KB -> comfortably under default scoped VMEM on v5e/v6e/v7x.
    out = pl.pallas_call(
        _decoder_kernel,
        out_shape=jax.ShapeDtypeStruct((B_pad, D_pad), jnp.float32),
        grid_spec=pltpu.PrefetchScalarGridSpec(
            num_scalar_prefetch=0,
            grid=grid,
            in_specs=[
                pl.BlockSpec((tb, NK), lambda i: (i, 0)),      # batch tile of y
                pl.BlockSpec((NK, D_pad), lambda i: (0, 0)),   # full (padded) W
                pl.BlockSpec((1, D_pad), lambda i: (0, 0)),    # full bias row
            ],
            out_specs=pl.BlockSpec((tb, D_pad), lambda i: (i, 0)),
        ),
        compiler_params=pltpu.CompilerParams(
            dimension_semantics=("parallel",),
        ),
        cost_estimate=pl.CostEstimate(
            flops=2 * B_pad * NK * D_pad,
            transcendentals=B_pad * D_pad,
            bytes_accessed=(
                y.size * y.dtype.itemsize
                + w.size * w.dtype.itemsize
                + b2.size * 4
                + B_pad * D_pad * 4
            ),
        ),
    )(y, w, b2)

    return out[:B, :D]


def decoder_reference(y, w, b, cast_bf16=False):
    if cast_bf16:
        y = y.astype(jnp.bfloat16).astype(jnp.float32)
        w = w.astype(jnp.bfloat16).astype(jnp.float32)
    logits = jnp.dot(y, w, precision=jax.lax.Precision.HIGHEST) + b
    return jax.nn.log_softmax(logits, axis=1)


if __name__ == "__main__":
    # Module hyperparameters (defaults of the PyTorch module).
    N, K = 6, 6
    image_size = 784
    B = 8  # small batch for the demo

    key = jax.random.PRNGKey(0)
    k_y, k_w, k_b = jax.random.split(key, 3)

    # Deterministic parameter init mirroring nn.Linear's U(-1/sqrt(fan_in), ...).
    fan_in = N * K
    bound = 1.0 / (fan_in ** 0.5)
    w = jax.random.uniform(k_w, (fan_in, image_size), jnp.float32, -bound, bound)
    b = jax.random.uniform(k_b, (image_size,), jnp.float32, -bound, bound)

    # Input y: the module flattens to (-1, N*K); build it already flattened.
    y = jax.random.normal(k_y, (B, N * K), jnp.float32)

    out = decoder_forward(y, w, b)
    out = jax.block_until_ready(out)
    assert out.shape == (B, image_size)

    # Tight check vs a reference using the same bf16 input rounding.
    ref_bf16 = decoder_reference(y, w, b, cast_bf16=True)
    assert jnp.allclose(out, ref_bf16, atol=2e-4, rtol=2e-4), "mismatch (bf16 ref)"

    # Loose sanity check vs the pure-f32 reference (bf16 input quantization only).
    ref_f32 = decoder_reference(y, w, b, cast_bf16=False)
    assert jnp.allclose(out, ref_f32, atol=5e-2, rtol=5e-2), "mismatch (f32 ref)"
    assert bool(jnp.all(jnp.isfinite(out)))

    print("KERNEL_OK")
</pallas_src>

<mosaic_0001>
module attributes {stable_mosaic.version = 11 : i64} {
  func.func @_decoder_kernel(%arg0: i32, %arg1: memref<8x36xbf16, #tpu.memory_space<vmem>>, %arg2: memref<36x896xbf16, #tpu.memory_space<vmem>>, %arg3: memref<1x896xf32, #tpu.memory_space<vmem>>, %arg4: memref<8x896xf32, #tpu.memory_space<vmem>>) attributes {dimension_semantics = [#tpu.dimension_semantics<parallel>], iteration_bounds = array<i64: 1>, scalar_prefetch = 0 : i64, scratch_operands = 0 : i64, tpu.core_type = #tpu.core_type<tc>, window_params = [{transform_indices = @transform_0, window_bounds = array<i64: 8, 36>}, {pipeline_mode = #tpu.pipeline_mode<synchronous>, transform_indices = @transform_1, window_bounds = array<i64: 36, 896>}, {pipeline_mode = #tpu.pipeline_mode<synchronous>, transform_indices = @transform_2, window_bounds = array<i64: 1, 896>}, {transform_indices = @transform_3, window_bounds = array<i64: 8, 896>}]} {
    %c0 = arith.constant 0 : index
    %c0_0 = arith.constant 0 : index
    %0 = vector.load %arg1[%c0, %c0_0] : memref<8x36xbf16, #tpu.memory_space<vmem>>, vector<8x36xbf16>
    %c0_1 = arith.constant 0 : index
    %c0_2 = arith.constant 0 : index
    %1 = vector.load %arg2[%c0_1, %c0_2] : memref<36x896xbf16, #tpu.memory_space<vmem>>, vector<36x896xbf16>
    %cst = arith.constant dense<0.000000e+00> : vector<8x896xf32>
    %2 = tpu.matmul %0, %1, %cst {dimension_numbers = #tpu.dot_dimension_numbers<[1], [0], [0], [1], [0, 0, 1, 1], [], []>} : vector<8x36xbf16>, vector<36x896xbf16>, vector<8x896xf32> -> vector<8x896xf32>
    %c0_3 = arith.constant 0 : index
    %c0_4 = arith.constant 0 : index
    %3 = vector.load %arg3[%c0_3, %c0_4] : memref<1x896xf32, #tpu.memory_space<vmem>>, vector<1x896xf32>
    %4 = vector.broadcast %3 : vector<1x896xf32> to vector<8x896xf32>
    %5 = arith.addf %2, %4 : vector<8x896xf32>
    %cst_5 = arith.constant dense<0xFF800000> : vector<8xf32>
    %6 = vector.multi_reduction <maximumf>, %5, %cst_5 [1] : vector<8x896xf32> to vector<8xf32>
    %7 = vector.shape_cast %6 : vector<8xf32> to vector<8x1xf32>
    %8 = vector.broadcast %7 : vector<8x1xf32> to vector<8x896xf32>
    %9 = arith.subf %5, %8 : vector<8x896xf32>
    %10 = math.exp %9 : vector<8x896xf32>
    %cst_6 = arith.constant dense<0.000000e+00> : vector<8xf32>
    %11 = vector.multi_reduction <add>, %10, %cst_6 [1] : vector<8x896xf32> to vector<8xf32>
    %12 = vector.shape_cast %11 : vector<8xf32> to vector<8x1xf32>
    %13 = math.log %12 : vector<8x1xf32>
    %14 = vector.broadcast %13 : vector<8x1xf32> to vector<8x896xf32>
    %15 = arith.subf %9, %14 : vector<8x896xf32>
    %c0_7 = arith.constant 0 : index
    %c0_8 = arith.constant 0 : index
    %16 = vector.load %arg4[%c0_7, %c0_8] : memref<8x896xf32, #tpu.memory_space<vmem>>, vector<8x896xf32>
    tpu.vector_store %arg4[%c0_7, %c0_8], %15 {strides = array<i32>} : memref<8x896xf32, #tpu.memory_space<vmem>>, vector<8x896xf32>,
    return
  }
  func.func @transform_0(%arg0: i32) -> (i32, i32) {
    %c0_i32 = arith.constant 0 : i32
    %c0_i32_0 = arith.constant 0 : i32
    return %arg0, %c0_i32 : i32, i32
  }
  func.func @transform_1(%arg0: i32) -> (i32, i32) {
    %c0_i32 = arith.constant 0 : i32
    %c0_i32_0 = arith.constant 0 : i32
    %c0_i32_1 = arith.constant 0 : i32
    return %c0_i32, %c0_i32_0 : i32, i32
  }
  func.func @transform_2(%arg0: i32) -> (i32, i32) {
    %c0_i32 = arith.constant 0 : i32
    %c0_i32_0 = arith.constant 0 : i32
    %c0_i32_1 = arith.constant 0 : i32
    return %c0_i32, %c0_i32_0 : i32, i32
  }
  func.func @transform_3(%arg0: i32) -> (i32, i32) {
    %c0_i32 = arith.constant 0 : i32
    %c0_i32_0 = arith.constant 0 : i32
    return %arg0, %c0_i32 : i32, i32
  }
}

</mosaic_0001>

<llo_original>
// kernel: decoder_forward.1
$region0: #{decoder_forward.1}
  #allocation0 [shape = 'u32[]', space=smem, size = 0x4, offset = 0x4, fixed_abs, tag = 'smem constant byte address 0x4 - core index']
  #allocation1 [shape = 'u32[144,128]{1,0:T(1,128)}', space=vmem, size = 0x12000, scoped, tag = 'internal scratch']
  %s0 = inlined_call_operand.vmem [shape: bf16[8,36], index: 0, kind: input, shape index: {}]
  %s1 = inlined_call_operand.vmem [shape: bf16[36,896], index: 1, kind: input, shape index: {}]
  %s2 = inlined_call_operand.vmem [shape: f32[1,896], index: 2, kind: input, shape index: {}]
  %s3 = inlined_call_operand.hbm [shape: f32[8,896], index: 3, kind: output, shape index: {}]
  %s4 = sld [smem:[#allocation0]]
  $region22: #{decoder_forward.1} parent=0
    _
  %s6 = ssub.s32 1, %s4
  %s7 = scalar_select 0, %s6, %s4
  $region1: #{decoder_forward.1} parent=0
    #allocation2 [shape = 'u8[28672]{0}', space=vmem, size = 0x7000, scoped, tag = 'output window, operand 0, single buffered']
    #allocation3 [shape = 's32[1]{0}', space=sflag, size = 0x4, scoped, tag = 'scoped memory for decoder_forward.1']
    %8 = vsyncpa [#allocation3], 0
    // Predicated region
    $region2: #{decoder_forward.1} parent=1 // pred_check
      _
    $region3: #{decoder_forward.1} parent=1 // pred_check_branch
      %10 = sbr.rel (0) target = $region5
    $region4: #{decoder_forward.1} parent=1 // pred_region
      _
    $region5: #{decoder_forward.1} parent=1 // pred_fallthru
      _
    // Predicated region
    $region6: #{decoder_forward.1} parent=1 // pred_check
      _
    $region7: #{decoder_forward.1} parent=1 // pred_check_branch
      %12 = sbr.rel (0) target = $region9
    $region8: #{decoder_forward.1} parent=1 // pred_region
      _
    $region9: #{decoder_forward.1} parent=1 // pred_fallthru
      _
    // Predicated region
    $region10: #{decoder_forward.1} parent=1 // pred_check
      _
    $region11: #{decoder_forward.1} parent=1 // pred_check_branch
      %14 = sbr.rel (0) target = $region13
    $region12: #{decoder_forward.1} parent=1 // pred_region
      _
    $region13: #{decoder_forward.1} parent=1 // pred_fallthru
      _
    %v16 = vld [vmem:[%s0] sm:$0xf]
    %v17 = vld [vmem:[%s1] sm:$0xff]
    %v18 = vld [vmem:[%s1 + $0x8] sm:$0xff]
    %v19 = vld [vmem:[%s1 + $0x10] sm:$0xff]
    %v20 = vld [vmem:[%s1 + $0x18] sm:$0xf]
    %v21 = vld [vmem:[%s1 + $0x1c] sm:$0xff]
    %v22 = vld [vmem:[%s1 + $0x24] sm:$0xff]
    %v23 = vld [vmem:[%s1 + $0x2c] sm:$0xff]
    %v24 = vld [vmem:[%s1 + $0x34] sm:$0xf]
    %v25 = vld [vmem:[%s1 + $0x38] sm:$0xff]
    %v26 = vld [vmem:[%s1 + $0x40] sm:$0xff]
    %v27 = vld [vmem:[%s1 + $0x48] sm:$0xff]
    %v28 = vld [vmem:[%s1 + $0x50] sm:$0xf]
    %v29 = vld [vmem:[%s1 + $0x54] sm:$0xff]
    %v30 = vld [vmem:[%s1 + $0x5c] sm:$0xff]
    %v31 = vld [vmem:[%s1 + $0x64] sm:$0xff]
    %v32 = vld [vmem:[%s1 + $0x6c] sm:$0xf]
    %v33 = vld [vmem:[%s1 + $0x70] sm:$0x33]
    %v34 = vld [vmem:[%s1 + $0x78] sm:$0x33]
    %v35 = vld [vmem:[%s1 + $0x80] sm:$0x33]
    %v36 = vld [vmem:[%s1 + $0x88] sm:$0x3]
    %v37 = vld [vmem:[%s2] sm:$0xff]
    %v39 = vlaneseq
    %v40 = vshrl.u32 %v39, 7
    %v41 = vsub.s32 0, %v40
    %v42 = vrot.slane %v37, %v41
    %v43 = vlaneseq
    %v44 = vshrl.u32 %v43, 7
    %v45 = vsub.s32 1, %v44
    %v46 = vrot.slane %v37, %v45
    %v47 = vlaneseq
    %v48 = vshrl.u32 %v47, 7
    %v49 = vsub.s32 2, %v48
    %v50 = vrot.slane %v37, %v49
    %v51 = vlaneseq
    %v52 = vshrl.u32 %v51, 7
    %v53 = vsub.s32 3, %v52
    %v54 = vrot.slane %v37, %v53
    %v55 = vlaneseq
    %v56 = vshrl.u32 %v55, 7
    %v57 = vsub.s32 4, %v56
    %v58 = vrot.slane %v37, %v57
    %v59 = vlaneseq
    %v60 = vshrl.u32 %v59, 7
    %v61 = vsub.s32 5, %v60
    %v62 = vrot.slane %v37, %v61
    %v63 = vlaneseq
    %v64 = vshrl.u32 %v63, 7
    %v65 = vsub.s32 6, %v64
    %v66 = vrot.slane %v37, %v65
    %v94 = vunpack.c.l.b16 %v17
    %v95 = vunpack.c.h.b16 %v17
    %v96 = vunpack.c.l.b16 %v18
    %v97 = vunpack.c.h.b16 %v18
    %v98 = vunpack.c.l.b16 %v19
    %v99 = vunpack.c.h.b16 %v19
    %v100 = vunpack.c.l.b16 %v20
    %v101 = vunpack.c.l.b16 %v21
    %v102 = vunpack.c.h.b16 %v21
    %v103 = vunpack.c.l.b16 %v22
    %v104 = vunpack.c.h.b16 %v22
    %v105 = vunpack.c.l.b16 %v23
    %v106 = vunpack.c.h.b16 %v23
    %v107 = vunpack.c.l.b16 %v24
    %v108 = vunpack.c.l.b16 %v25
    %v109 = vunpack.c.h.b16 %v25
    %v110 = vunpack.c.l.b16 %v26
    %v111 = vunpack.c.h.b16 %v26
    %v112 = vunpack.c.l.b16 %v27
    %v113 = vunpack.c.h.b16 %v27
    %v114 = vunpack.c.l.b16 %v28
    %v115 = vunpack.c.l.b16 %v29
    %v116 = vunpack.c.h.b16 %v29
    %v117 = vunpack.c.l.b16 %v30
    %v118 = vunpack.c.h.b16 %v30
    %v119 = vunpack.c.l.b16 %v31
    %v120 = vunpack.c.h.b16 %v31
    %v121 = vunpack.c.l.b16 %v32
    %v122 = vunpack.c.l.b16 %v33
    %v123 = vunpack.c.h.b16 %v33
    %v124 = vunpack.c.l.b16 %v34
    %v125 = vunpack.c.h.b16 %v34
    %v126 = vunpack.c.l.b16 %v35
    %v127 = vunpack.c.h.b16 %v35
    %v128 = vunpack.c.l.b16 %v36
    %v129 = vpack.c.b16 %v101, %v94
    %v130 = vpack.c.b16 %v102, %v95
    %v131 = vpack.c.b16 %v103, %v96
    %v132 = vpack.c.b16 %v104, %v97
    %v133 = vpack.c.b16 %v105, %v98
    %v134 = vpack.c.b16 %v106, %v99
    %v135 = vpack.c.b16 %v107, %v100
    %v136 = vpack.c.b16 %v115, %v108
    %v137 = vpack.c.b16 %v116, %v109
    %v138 = vpack.c.b16 %v117, %v110
    %v139 = vpack.c.b16 %v118, %v111
    %v140 = vpack.c.b16 %v119, %v112
    %v141 = vpack.c.b16 %v120, %v113
    %v142 = vpack.c.b16 %v121, %v114
    %v143 = vpack.c.b16 %v122, %v122
    %v144 = vpack.c.b16 %v123, %v123
    %v145 = vpack.c.b16 %v124, %v124
    %v146 = vpack.c.b16 %v125, %v125
    %v147 = vpack.c.b16 %v126, %v126
    %v148 = vpack.c.b16 %v127, %v127
    %v149 = vpack.c.b16 %v128, %v128
    %vm164 = vcmask 293888
    %v166 = vsel %vm164, %v16, 0
    %vm168 = vcmask 1041408
    %v170 = vsel %vm168, %v143, 0
    %v173 = vsel %vm168, %v144, 0
    %v176 = vsel %vm168, %v145, 0
    %v179 = vsel %vm168, %v146, 0
    %v182 = vsel %vm168, %v147, 0
    %v185 = vsel %vm168, %v148, 0
    %v188 = vsel %vm168, %v149, 0
    %190 = vmatprep.subr.bf16.mxu0 %v130
    %191 = vmatpush1.bf16.msra.mxu0 %v129
    %192 = vmatprep.subr.bf16.mxu0 %v137
    %193 = vmatpush1.bf16.msra.mxu0 %v136
    %194 = vmatprep.subr.bf16.mxu0 %v173
    %195 = vmatpush1.bf16.msra.mxu0 %v170
    %196 = vmatprep.subr.bf16.mxu0 0
    %197 = vmatpush1.bf16.msra.mxu0 0
    %198 = vmatprep.subr.bf16.mxu0 0
    %199 = vmatpush1.bf16.msra.mxu0 0
    %200 = vmatprep.subr.bf16.mxu0 0
    %201 = vmatpush1.bf16.msra.mxu0 0
    %202 = vmatprep.subr.bf16.mxu0 0
    %203 = vmatpush1.bf16.msra.mxu0 0
    %204 = vmatprep.subr.bf16.mxu0 0
    %205 = vmatpush1.bf16.msra.mxu0 0
    %206 = vmatprep.subr.bf16.mxu0 0
    %207 = vmatpush1.bf16.msra.mxu0 0
    %208 = vmatprep.subr.bf16.mxu0 0
    %209 = vmatpush1.bf16.msra.mxu0 0
    %210 = vmatprep.subr.bf16.mxu0 0
    %211 = vmatpush1.bf16.msra.mxu0 0
    %212 = vmatprep.subr.bf16.mxu0 0
    %213 = vmatpush1.bf16.msra.mxu0 0
    %214 = vmatprep.subr.bf16.mxu0 0
    %215 = vmatpush1.bf16.msra.mxu0 0
    %216 = vmatprep.subr.bf16.mxu0 0
    %217 = vmatpush1.bf16.msra.mxu0 0
    %218 = vmatprep.subr.bf16.mxu0 0
    %219 = vmatpush1.bf16.msra.mxu0 0
    %220 = vmatprep.subr.bf16.mxu0 0
    %221 = vmatpush1.bf16.msra.mxu0 0
    %222 = vmatprep.mubr.bf16.mxu0 0
    %223 = vmatmul.mubr.bf16.gmra.mrb[0].mxu0 %v166
    %v224 = vpop.f32.mrb[0].mxu0
    %v225 = vadd.f32 %v42, %v224
    %v226 = vpop.f32.mrb[0].mxu0
    %v227 = vadd.f32 %v46, %v226
    %v228 = vpop.f32.mrb[0].mxu0
    %v229 = vpop.f32.mrb[0].mxu0
    %230 = vdwg.mxu0
    %231 = vmatprep.subr.bf16.mxu0 %v132
    %232 = vmatpush1.bf16.msra.mxu0 %v131
    %233 = vmatprep.subr.bf16.mxu0 %v139
    %234 = vmatpush1.bf16.msra.mxu0 %v138
    %235 = vmatprep.subr.bf16.mxu0 %v179
    %236 = vmatpush1.bf16.msra.mxu0 %v176
    %237 = vmatprep.subr.bf16.mxu0 0
    %238 = vmatpush1.bf16.msra.mxu0 0
    %239 = vmatprep.subr.bf16.mxu0 0
    %240 = vmatpush1.bf16.msra.mxu0 0
    %241 = vmatprep.subr.bf16.mxu0 0
    %242 = vmatpush1.bf16.msra.mxu0 0
    %243 = vmatprep.subr.bf16.mxu0 0
    %244 = vmatpush1.bf16.msra.mxu0 0
    %245 = vmatprep.subr.bf16.mxu0 0
    %246 = vmatpush1.bf16.msra.mxu0 0
    %247 = vmatprep.subr.bf16.mxu0 0
    %248 = vmatpush1.bf16.msra.mxu0 0
    %249 = vmatprep.subr.bf16.mxu0 0
    %250 = vmatpush1.bf16.msra.mxu0 0
    %251 = vmatprep.subr.bf16.mxu0 0
    %252 = vmatpush1.bf16.msra.mxu0 0
    %253 = vmatprep.subr.bf16.mxu0 0
    %254 = vmatpush1.bf16.msra.mxu0 0
    %255 = vmatprep.subr.bf16.mxu0 0
    %256 = vmatpush1.bf16.msra.mxu0 0
    %257 = vmatprep.subr.bf16.mxu0 0
    %258 = vmatpush1.bf16.msra.mxu0 0
    %259 = vmatprep.subr.bf16.mxu0 0
    %260 = vmatpush1.bf16.msra.mxu0 0
    %261 = vmatprep.subr.bf16.mxu0 0
    %262 = vmatpush1.bf16.msra.mxu0 0
    %263 = vmatprep.mubr.bf16.mxu0 0
    %264 = vmatmul.mubr.bf16.gmra.mrb[0].mxu0 %v166
    %v265 = vpop.f32.mrb[0].mxu0
    %v266 = vadd.f32 %v50, %v265
    %v267 = vpop.f32.mrb[0].mxu0
    %v268 = vadd.f32 %v54, %v267
    %v269 = vpop.f32.mrb[0].mxu0
    %v270 = vpop.f32.mrb[0].mxu0
    %271 = vdwg.mxu0
    %272 = vmatprep.subr.bf16.mxu0 %v134
    %273 = vmatpush1.bf16.msra.mxu0 %v133
    %274 = vmatprep.subr.bf16.mxu0 %v141
    %275 = vmatpush1.bf16.msra.mxu0 %v140
    %276 = vmatprep.subr.bf16.mxu0 %v185
    %277 = vmatpush1.bf16.msra.mxu0 %v182
    %278 = vmatprep.subr.bf16.mxu0 0
    %279 = vmatpush1.bf16.msra.mxu0 0
    %280 = vmatprep.subr.bf16.mxu0 0
    %281 = vmatpush1.bf16.msra.mxu0 0
    %282 = vmatprep.subr.bf16.mxu0 0
    %283 = vmatpush1.bf16.msra.mxu0 0
    %284 = vmatprep.subr.bf16.mxu0 0
    %285 = vmatpush1.bf16.msra.mxu0 0
    %286 = vmatprep.subr.bf16.mxu0 0
    %287 = vmatpush1.bf16.msra.mxu0 0
    %288 = vmatprep.subr.bf16.mxu0 0
    %289 = vmatpush1.bf16.msra.mxu0 0
    %290 = vmatprep.subr.bf16.mxu0 0
    %291 = vmatpush1.bf16.msra.mxu0 0
    %292 = vmatprep.subr.bf16.mxu0 0
    %293 = vmatpush1.bf16.msra.mxu0 0
    %294 = vmatprep.subr.bf16.mxu0 0
    %295 = vmatpush1.bf16.msra.mxu0 0
    %296 = vmatprep.subr.bf16.mxu0 0
    %297 = vmatpush1.bf16.msra.mxu0 0
    %298 = vmatprep.subr.bf16.mxu0 0
    %299 = vmatpush1.bf16.msra.mxu0 0
    %300 = vmatprep.subr.bf16.mxu0 0
    %301 = vmatpush1.bf16.msra.mxu0 0
    %302 = vmatprep.subr.bf16.mxu0 0
    %303 = vmatpush1.bf16.msra.mxu0 0
    %304 = vmatprep.mubr.bf16.mxu0 0
    %305 = vmatmul.mubr.bf16.gmra.mrb[0].mxu0 %v166
    %v306 = vpop.f32.mrb[0].mxu0
    %v307 = vadd.f32 %v58, %v306
    %v308 = vpop.f32.mrb[0].mxu0
    %v309 = vadd.f32 %v62, %v308
    %v310 = vpop.f32.mrb[0].mxu0
    %v311 = vpop.f32.mrb[0].mxu0
    %312 = vdwg.mxu0
    %313 = vmatprep.subr.bf16.mxu0 0
    %314 = vmatpush1.bf16.msra.mxu0 %v135
    %315 = vmatprep.subr.bf16.mxu0 0
    %316 = vmatpush1.bf16.msra.mxu0 %v142
    %317 = vmatprep.subr.bf16.mxu0 0
    %318 = vmatpush1.bf16.msra.mxu0 %v188
    %319 = vmatprep.subr.bf16.mxu0 0
    %320 = vmatpush1.bf16.msra.mxu0 0
    %321 = vmatprep.subr.bf16.mxu0 0
    %322 = vmatpush1.bf16.msra.mxu0 0
    %323 = vmatprep.subr.bf16.mxu0 0
    %324 = vmatpush1.bf16.msra.mxu0 0
    %325 = vmatprep.subr.bf16.mxu0 0
    %326 = vmatpush1.bf16.msra.mxu0 0
    %327 = vmatprep.subr.bf16.mxu0 0
    %328 = vmatpush1.bf16.msra.mxu0 0
    %329 = vmatprep.subr.bf16.mxu0 0
    %330 = vmatpush1.bf16.msra.mxu0 0
    %331 = vmatprep.subr.bf16.mxu0 0
    %332 = vmatpush1.bf16.msra.mxu0 0
    %333 = vmatprep.subr.bf16.mxu0 0
    %334 = vmatpush1.bf16.msra.mxu0 0
    %335 = vmatprep.subr.bf16.mxu0 0
    %336 = vmatpush1.bf16.msra.mxu0 0
    %337 = vmatprep.subr.bf16.mxu0 0
    %338 = vmatpush1.bf16.msra.mxu0 0
    %339 = vmatprep.subr.bf16.mxu0 0
    %340 = vmatpush1.bf16.msra.mxu0 0
    %341 = vmatprep.subr.bf16.mxu0 0
    %342 = vmatpush1.bf16.msra.mxu0 0
    %343 = vmatprep.subr.bf16.mxu0 0
    %344 = vmatpush1.bf16.msra.mxu0 0
    %345 = vmatprep.mubr.bf16.mxu0 0
    %346 = vmatmul.mubr.bf16.gmra.mrb[0].mxu0 %v166
    %v347 = vpop.f32.mrb[0].mxu0
    %v348 = vadd.f32 %v66, %v347
    %v349 = vpop.f32.mrb[0].mxu0
    %v350 = vpop.f32.mrb[0].mxu0
    %v351 = vpop.f32.mrb[0].mxu0
    %352 = vdwg.mxu0
    %v353 = vmax.f32 %v225, %v307
    %v354 = vmax.f32 %v227, %v309
    %v355 = vmax.f32 %v266, %v348
    %v356 = vmax.f32 %v353, %v354
    %v357 = vmax.f32 %v355, %v268
    %v358 = vmax.f32 %v356, %v357
    %359 = vmax.xlane.f32.xlu0 %v358
    %v360 = vpop.xlane.xlu0 %359
    %v361 = vsub.f32 %v225, %v360
    %v362 = vsub.f32 %v227, %v360
    %v363 = vsub.f32 %v266, %v360
    %v364 = vsub.f32 %v268, %v360
    %v365 = vsub.f32 %v307, %v360
    %v366 = vsub.f32 %v309, %v360
    %v367 = vsub.f32 %v348, %v360
    %v368 = vmul.f32 %v361, 1.442695
    %v369 = vpow.pop %v368
    %v370 = vmul.f32 %v362, 1.442695
    %v371 = vpow.pop %v370
    %v372 = vmul.f32 %v363, 1.442695
    %v373 = vpow.pop %v372
    %v374 = vmul.f32 %v364, 1.442695
    %v375 = vpow.pop %v374
    %v376 = vmul.f32 %v365, 1.442695
    %v377 = vpow.pop %v376
    %v378 = vmul.f32 %v366, 1.442695
    %v379 = vpow.pop %v378
    %v380 = vmul.f32 %v367, 1.442695
    %v381 = vpow.pop %v380
    %v382 = vadd.f32 %v369, %v371
    %v383 = vadd.f32 %v382, %v373
    %v384 = vadd.f32 %v383, %v375
    %v385 = vadd.f32 %v384, %v377
    %v386 = vadd.f32 %v385, %v379
    %v387 = vadd.f32 %v386, %v381
    %388 = vadd.xlane.f32.xlu0 %v387
    %v389 = vpop.xlane.xlu0 %388
    %v390 = vlog2.pop %v389
    %v391 = vmul.f32 %v390, 0.6931472
    %v392 = vsub.f32 %v361, %v391
    %v393 = vsub.f32 %v362, %v391
    %v394 = vsub.f32 %v363, %v391
    %v395 = vsub.f32 %v364, %v391
    %v396 = vsub.f32 %v365, %v391
    %v397 = vsub.f32 %v366, %v391
    %v398 = vsub.f32 %v367, %v391
    %399 = vst [vmem:[#allocation2] sm:$0xff] %v392
    %400 = vst [vmem:[#allocation2 + $0x8] sm:$0xff] %v393
    %401 = vst [vmem:[#allocation2 + $0x10] sm:$0xff] %v394
    %402 = vst [vmem:[#allocation2 + $0x18] sm:$0xff] %v395
    %403 = vst [vmem:[#allocation2 + $0x20] sm:$0xff] %v396
    %404 = vst [vmem:[#allocation2 + $0x28] sm:$0xff] %v397
    %405 = vst [vmem:[#allocation2 + $0x30] sm:$0xff] %v398
    // Predicated region
    $region14: #{decoder_forward.1} parent=1 // pred_check
      _
    $region15: #{decoder_forward.1} parent=1 // pred_check_branch
      %407 = sbr.rel (0) target = $region17
    $region16: #{decoder_forward.1} parent=1 // pred_region
      %s409 = ssub.s32 896, 896
      %410 = vsyncadd [#allocation3], %s409
      %s412 = sshll.u32 [#allocation2], 4
      %s413 = int_to_ptr.vmem [resolvable:$true] %s412
      %415 = dma.vmem_to_hbm [thread:$0]  %s413, 896, %s3, [#allocation3]
    $region17: #{decoder_forward.1} parent=1 // pred_fallthru
      _
    // Predicated region
    $region18: #{decoder_forward.1} parent=1 // pred_check
      _
    $region19: #{decoder_forward.1} parent=1 // pred_check_branch
      %417 = sbr.rel (0) target = $region21
    $region20: #{decoder_forward.1} parent=1 // pred_region
      %418 = dma.done [#allocation3], 896
    $region21: #{decoder_forward.1} parent=1 // pred_fallthru
      _
    %419 = vsyncpa [#allocation3], 1

</llo_original>
